<compile_context>
chip_gen: v5e
topology: v5e:2x2
jax: 0.10.0
libtpu: 0.0.40
codegen_flags: <defaults>
</compile_context>

<pallas_src>
import functools

import jax
import jax.numpy as jnp
from jax.experimental import pallas as pl
from jax.experimental.pallas import tpu as pltpu


def _round_up(x, m):
    return ((x + m - 1) // m) * m


def _pick_tile_b(batch):
    """Batch tile: minimize padding waste; prefer >=2 grid steps for big batch."""
    b8 = _round_up(max(batch, 8), 8)
    if b8 <= 256:
        return b8  # single tile, at most 7 padded rows
    best_t, best_key = None, None
    for t in (1024, 512, 256, 128):
        b_pad = _round_up(batch, t)
        steps = b_pad // t
        # (padding waste, penalize a 1-step grid on megacore parts, prefer larger tile)
        key = (b_pad - batch, 0 if steps >= 2 else 1, -t)
        if best_key is None or key < best_key:
            best_key, best_t = key, t
    return best_t


def _aux_classifier_kernel(*refs, n_rest):
    """Fused MLP forward on one batch tile.

    refs (n_rest > 0): x(tile_b,in) bf16, w0(in,Hp) bf16, ws(n_rest,Hp,Hp) bf16,
                       b(n_layers,1,Hp) f32, wo(Hp,Cp) bf16, bo(1,Cp) f32, out(tile_b,Cp) f32
    refs (n_rest == 0): same without the ws stack.
    """
    if n_rest > 0:
        x_ref, w0_ref, ws_ref, b_ref, wo_ref, bo_ref, out_ref = refs
    else:
        x_ref, w0_ref, b_ref, wo_ref, bo_ref, out_ref = refs
        ws_ref = None

    # Layer 0: bf16 operands on the MXU, f32 accumulation + f32 epilogue.
    h = jnp.dot(x_ref[...], w0_ref[...], preferred_element_type=jnp.float32)
    h = jnp.maximum(h + b_ref[0], 0.0)

    for layer in range(n_rest):  # static unroll over the remaining hidden layers
        y = jnp.dot(h.astype(ws_ref.dtype), ws_ref[layer],
                    preferred_element_type=jnp.float32)
        h = jnp.maximum(y + b_ref[layer + 1], 0.0)

    logits = jnp.dot(h.astype(wo_ref.dtype), wo_ref[...],
                     preferred_element_type=jnp.float32) + bo_ref[...]
    out_ref[...] = logits


def auxiliary_classifier_forward(x, layer_params, fc_out_params, *, eps=1e-5):
    """Run the fused AuxiliaryClassifier kernel (inference / eval mode).

    Args:
      x: (batch, input_dim) float32 latent vectors.
      layer_params: list (length n_layers) of tuples
          (W (in, out), b (out,), gamma (out,), beta (out,),
           running_mean (out,), running_var (out,))  -- nn.Linear weights
          already transposed to (in, out).
      fc_out_params: (W_out (hidden, n_classes), b_out (n_classes,)).
      eps: BatchNorm1d eps.

    Returns:
      logits: (batch, n_classes) float32.
    """
    batch, input_dim = x.shape
    n_layers = len(layer_params)
    assert n_layers >= 1
    hidden_dim = layer_params[0][0].shape[1]
    n_classes = fc_out_params[0].shape[1]
    n_rest = n_layers - 1

    h_pad = _round_up(hidden_dim, 128)
    c_pad = _round_up(n_classes, 128)
    tile_b = _pick_tile_b(batch)
    b_pad = _round_up(batch, tile_b)

    # ---- fold eval-mode BN into the Linears in f32, then cast to bf16 --------
    folded_w, folded_b = [], []
    for (w, b, gamma, beta, mean, var) in layer_params:
        s = gamma.astype(jnp.float32) / jnp.sqrt(var.astype(jnp.float32) + eps)
        folded_w.append(w.astype(jnp.float32) * s[None, :])
        folded_b.append((b.astype(jnp.float32) - mean.astype(jnp.float32)) * s
                        + beta.astype(jnp.float32))

    # Layer-0 weight: its own operand (no square over-padding), lane dim -> 128.
    w0 = jnp.zeros((input_dim, h_pad), jnp.float32)
    w0 = w0.at[:, :hidden_dim].set(folded_w[0]).astype(jnp.bfloat16)

    # Remaining hidden layers: stacked (n_rest, h_pad, h_pad) bf16.
    w_stack = None
    if n_rest > 0:
        w_stack = jnp.zeros((n_rest, h_pad, h_pad), jnp.float32)
        for i in range(n_rest):
            wi = folded_w[i + 1]
            w_stack = w_stack.at[i, : wi.shape[0], : wi.shape[1]].set(wi)
        w_stack = w_stack.astype(jnp.bfloat16)

    # Biases stay f32 (epilogue precision). Padded lanes are exactly zero.
    b_stack = jnp.zeros((n_layers, 1, h_pad), jnp.float32)
    for i in range(n_layers):
        b_stack = b_stack.at[i, 0, :hidden_dim].set(folded_b[i])

    w_out, b_out = fc_out_params
    wo_p = jnp.zeros((h_pad, c_pad), jnp.float32)
    wo_p = wo_p.at[: w_out.shape[0], : w_out.shape[1]].set(
        w_out.astype(jnp.float32)).astype(jnp.bfloat16)
    bo_p = jnp.zeros((1, c_pad), jnp.float32)
    bo_p = bo_p.at[0, :n_classes].set(b_out.astype(jnp.float32))

    # x: bf16, pad ONLY the batch axis (feature dim is a full-extent block).
    x_in = x.astype(jnp.bfloat16)
    if b_pad != batch:
        x_in = jnp.pad(x_in, ((0, b_pad - batch), (0, 0)))

    # ---- cost estimate from the padded shapes actually executed --------------
    flops = 2 * b_pad * (input_dim * h_pad + n_rest * h_pad * h_pad + h_pad * c_pad)
    weight_bytes = 2 * (input_dim * h_pad + n_rest * h_pad * h_pad + h_pad * c_pad)
    bias_bytes = 4 * (n_layers * h_pad + c_pad)
    bytes_accessed = 2 * b_pad * input_dim + 4 * b_pad * c_pad + weight_bytes + bias_bytes
    cost = pl.CostEstimate(flops=flops, transcendentals=0,
                           bytes_accessed=bytes_accessed)

    # ---- generation-aware VMEM cap -------------------------------------------
    try:
        vmem_cap = int(pltpu.get_tpu_info().vmem_capacity_bytes)
    except Exception:
        vmem_cap = 64 << 20  # conservative (v7x per-TC) if the query fails

    grid = (b_pad // tile_b,)
    kernel = functools.partial(_aux_classifier_kernel, n_rest=n_rest)

    def _resident_spec(shape, single_buffered):
        idx = lambda i, _nd=len(shape): (0,) * _nd
        if single_buffered:
            return pl.BlockSpec(shape, idx, pipeline_mode=pl.Buffered(1))
        return pl.BlockSpec(shape, idx)

    def _run(single_buffered):
        in_specs = [pl.BlockSpec((tile_b, input_dim), lambda i: (i, 0))]
        operands = [x_in]
        in_specs.append(_resident_spec((input_dim, h_pad), single_buffered))
        operands.append(w0)
        if n_rest > 0:
            in_specs.append(_resident_spec((n_rest, h_pad, h_pad), single_buffered))
            operands.append(w_stack)
        in_specs.append(_resident_spec((n_layers, 1, h_pad), single_buffered))
        operands.append(b_stack)
        in_specs.append(_resident_spec((h_pad, c_pad), single_buffered))
        operands.append(wo_p)
        in_specs.append(_resident_spec((1, c_pad), single_buffered))
        operands.append(bo_p)

        res_bufs = 1 if single_buffered else 2
        resident_bytes = res_bufs * (weight_bytes + bias_bytes)
        io_bytes = 2 * (tile_b * input_dim * 2 + tile_b * c_pad * 4)  # dbl-buffered x/out
        act_bytes = 2 * tile_b * h_pad * 4                            # f32 activations
        needed = resident_bytes + io_bytes + act_bytes + (2 << 20)
        vmem_limit = int(min(max(needed, 8 << 20), int(0.85 * vmem_cap)))

        out = pl.pallas_call(
            kernel,
            out_shape=jax.ShapeDtypeStruct((b_pad, c_pad), jnp.float32),
            grid=grid,
            in_specs=in_specs,
            out_specs=pl.BlockSpec((tile_b, c_pad), lambda i: (i, 0)),
            compiler_params=pltpu.CompilerParams(
                dimension_semantics=("parallel",),
                vmem_limit_bytes=vmem_limit,
            ),
            cost_estimate=cost,
        )(*operands)
        return jax.block_until_ready(out)

    try:
        out_pad = _run(single_buffered=True)
    except Exception:
        # pl.Buffered(1) not accepted by this JAX build -> default buffering.
        out_pad = _run(single_buffered=False)

    return out_pad[:batch, :n_classes]


def _reference_forward(x, layer_params, fc_out_params, eps=1e-5):
    h = x
    for (w, b, gamma, beta, mean, var) in layer_params:
        y = h @ w + b
        y = (y - mean) / jnp.sqrt(var + eps) * gamma + beta
        h = jnp.maximum(y, 0.0)
    return h @ fc_out_params[0] + fc_out_params[1]


if __name__ == "__main__":
    # Small config consistent with the module:
    #   input_dim (encoder_spk.latent_dim) = 32
    #   hidden_dim (classifier_aux.hidden_dim) = 32
    #   n_layers (classifier_aux.n_layers) = 2
    #   n_classes = 3
    batch, input_dim, hidden_dim, n_layers, n_classes = 8, 32, 32, 2, 3
    eps = 1e-5  # nn.BatchNorm1d default

    key = jax.random.PRNGKey(0)
    keys = jax.random.split(key, 3 + 6 * n_layers)

    x = jax.random.normal(keys[0], (batch, input_dim), dtype=jnp.float32)

    layer_params = []
    k_idx = 1
    in_dim = input_dim
    for layer in range(n_layers):
        w = 0.1 * jax.random.normal(keys[k_idx], (in_dim, hidden_dim), jnp.float32)
        b = 0.1 * jax.random.normal(keys[k_idx + 1], (hidden_dim,), jnp.float32)
        gamma = 1.0 + 0.05 * jax.random.normal(keys[k_idx + 2], (hidden_dim,), jnp.float32)
        beta = 0.05 * jax.random.normal(keys[k_idx + 3], (hidden_dim,), jnp.float32)
        # Non-trivial running statistics (eval-mode BN) to exercise the folding.
        running_mean = 0.1 * jax.random.normal(keys[k_idx + 4], (hidden_dim,), jnp.float32)
        running_var = 1.0 + 0.1 * jax.nn.softplus(
            jax.random.normal(keys[k_idx + 5], (hidden_dim,), jnp.float32)
        )
        k_idx += 6
        layer_params.append((w, b, gamma, beta, running_mean, running_var))
        in_dim = hidden_dim

    w_out = 0.1 * jax.random.normal(keys[k_idx], (hidden_dim, n_classes), jnp.float32)
    b_out = 0.1 * jax.random.normal(keys[k_idx + 1], (n_classes,), jnp.float32)
    fc_out_params = (w_out, b_out)

    logits = auxiliary_classifier_forward(x, layer_params, fc_out_params, eps=eps)
    logits = jax.block_until_ready(logits)

    ref = _reference_forward(x, layer_params, fc_out_params, eps=eps)
    assert logits.shape == (batch, n_classes)
    # bf16 MXU operands -> relaxed tolerance vs the f32 reference.
    assert jnp.allclose(logits, ref, atol=2e-2, rtol=2e-2), "mismatch vs reference"

    print("KERNEL_OK")
</pallas_src>

<mosaic_0001>
module attributes {stable_mosaic.version = 11 : i64} {
  func.func @_aux_classifier_kernel(%arg0: i32, %arg1: memref<8x32xbf16, #tpu.memory_space<vmem>>, %arg2: memref<32x128xbf16, #tpu.memory_space<vmem>>, %arg3: memref<1x128x128xbf16, #tpu.memory_space<vmem>>, %arg4: memref<2x1x128xf32, #tpu.memory_space<vmem>>, %arg5: memref<128x128xbf16, #tpu.memory_space<vmem>>, %arg6: memref<1x128xf32, #tpu.memory_space<vmem>>, %arg7: memref<8x128xf32, #tpu.memory_space<vmem>>) attributes {dimension_semantics = [#tpu.dimension_semantics<parallel>], iteration_bounds = array<i64: 1>, scalar_prefetch = 0 : i64, scratch_operands = 0 : i64, tpu.core_type = #tpu.core_type<tc>, window_params = [{transform_indices = @transform_0, window_bounds = array<i64: 8, 32>}, {pipeline_mode = #tpu.pipeline_mode<synchronous>, transform_indices = @transform_1, window_bounds = array<i64: 32, 128>}, {pipeline_mode = #tpu.pipeline_mode<synchronous>, transform_indices = @transform_2, window_bounds = array<i64: 1, 128, 128>}, {pipeline_mode = #tpu.pipeline_mode<synchronous>, transform_indices = @transform_3, window_bounds = array<i64: 2, 1, 128>}, {pipeline_mode = #tpu.pipeline_mode<synchronous>, transform_indices = @transform_4, window_bounds = array<i64: 128, 128>}, {pipeline_mode = #tpu.pipeline_mode<synchronous>, transform_indices = @transform_5, window_bounds = array<i64: 1, 128>}, {transform_indices = @transform_6, window_bounds = array<i64: 8, 128>}]} {
    %c0 = arith.constant 0 : index
    %c0_0 = arith.constant 0 : index
    %0 = vector.load %arg1[%c0, %c0_0] : memref<8x32xbf16, #tpu.memory_space<vmem>>, vector<8x32xbf16>
    %c0_1 = arith.constant 0 : index
    %c0_2 = arith.constant 0 : index
    %1 = vector.load %arg2[%c0_1, %c0_2] : memref<32x128xbf16, #tpu.memory_space<vmem>>, vector<32x128xbf16>
    %cst = arith.constant dense<0.000000e+00> : vector<8x128xf32>
    %2 = tpu.matmul %0, %1, %cst {dimension_numbers = #tpu.dot_dimension_numbers<[1], [0], [0], [1], [0, 0, 1, 1], [], []>} : vector<8x32xbf16>, vector<32x128xbf16>, vector<8x128xf32> -> vector<8x128xf32>
    %c0_3 = arith.constant 0 : index
    %c0_4 = arith.constant 0 : index
    %c0_5 = arith.constant 0 : index
    %3 = vector.load %arg4[%c0_3, %c0_4, %c0_5] : memref<2x1x128xf32, #tpu.memory_space<vmem>>, vector<1x1x128xf32>
    %4 = vector.shape_cast %3 : vector<1x1x128xf32> to vector<1x128xf32>
    %5 = vector.broadcast %4 : vector<1x128xf32> to vector<8x128xf32>
    %6 = arith.addf %2, %5 : vector<8x128xf32>
    %cst_6 = arith.constant 0.000000e+00 : f32
    %7 = vector.broadcast %cst_6 : f32 to vector<8x128xf32>
    %8 = arith.maximumf %6, %7 : vector<8x128xf32>
    %9 = arith.truncf %8 : vector<8x128xf32> to vector<8x128xbf16>
    %c0_7 = arith.constant 0 : index
    %c0_8 = arith.constant 0 : index
    %c0_9 = arith.constant 0 : index
    %10 = vector.load %arg3[%c0_7, %c0_8, %c0_9] : memref<1x128x128xbf16, #tpu.memory_space<vmem>>, vector<1x128x128xbf16>
    %11 = vector.shape_cast %10 : vector<1x128x128xbf16> to vector<128x128xbf16>
    %cst_10 = arith.constant dense<0.000000e+00> : vector<8x128xf32>
    %12 = tpu.matmul %9, %11, %cst_10 {dimension_numbers = #tpu.dot_dimension_numbers<[1], [0], [0], [1], [0, 0, 1, 1], [], []>} : vector<8x128xbf16>, vector<128x128xbf16>, vector<8x128xf32> -> vector<8x128xf32>
    %c1 = arith.constant 1 : index
    %c0_11 = arith.constant 0 : index
    %c0_12 = arith.constant 0 : index
    %13 = vector.load %arg4[%c1, %c0_11, %c0_12] : memref<2x1x128xf32, #tpu.memory_space<vmem>>, vector<1x1x128xf32>
    %14 = vector.shape_cast %13 : vector<1x1x128xf32> to vector<1x128xf32>
    %15 = vector.broadcast %14 : vector<1x128xf32> to vector<8x128xf32>
    %16 = arith.addf %12, %15 : vector<8x128xf32>
    %cst_13 = arith.constant 0.000000e+00 : f32
    %17 = vector.broadcast %cst_13 : f32 to vector<8x128xf32>
    %18 = arith.maximumf %16, %17 : vector<8x128xf32>
    %19 = arith.truncf %18 : vector<8x128xf32> to vector<8x128xbf16>
    %c0_14 = arith.constant 0 : index
    %c0_15 = arith.constant 0 : index
    %20 = vector.load %arg5[%c0_14, %c0_15] : memref<128x128xbf16, #tpu.memory_space<vmem>>, vector<128x128xbf16>
    %cst_16 = arith.constant dense<0.000000e+00> : vector<8x128xf32>
    %21 = tpu.matmul %19, %20, %cst_16 {dimension_numbers = #tpu.dot_dimension_numbers<[1], [0], [0], [1], [0, 0, 1, 1], [], []>} : vector<8x128xbf16>, vector<128x128xbf16>, vector<8x128xf32> -> vector<8x128xf32>
    %c0_17 = arith.constant 0 : index
    %c0_18 = arith.constant 0 : index
    %22 = vector.load %arg6[%c0_17, %c0_18] : memref<1x128xf32, #tpu.memory_space<vmem>>, vector<1x128xf32>
    %23 = vector.broadcast %22 : vector<1x128xf32> to vector<8x128xf32>
    %24 = arith.addf %21, %23 : vector<8x128xf32>
    %c0_19 = arith.constant 0 : index
    %c0_20 = arith.constant 0 : index
    %25 = vector.load %arg7[%c0_19, %c0_20] : memref<8x128xf32, #tpu.memory_space<vmem>>, vector<8x128xf32>
    tpu.vector_store %arg7[%c0_19, %c0_20], %24 {strides = array<i32>} : memref<8x128xf32, #tpu.memory_space<vmem>>, vector<8x128xf32>,
    return
  }
  func.func @transform_0(%arg0: i32) -> (i32, i32) {
    %c0_i32 = arith.constant 0 : i32
    %c0_i32_0 = arith.constant 0 : i32
    return %arg0, %c0_i32 : i32, i32
  }
  func.func @transform_1(%arg0: i32) -> (i32, i32) {
    %c0_i32 = arith.constant 0 : i32
    %c0_i32_0 = arith.constant 0 : i32
    %c0_i32_1 = arith.constant 0 : i32
    return %c0_i32, %c0_i32_0 : i32, i32
  }
  func.func @transform_2(%arg0: i32) -> (i32, i32, i32) {
    %c0_i32 = arith.constant 0 : i32
    %c0_i32_0 = arith.constant 0 : i32
    %c0_i32_1 = arith.constant 0 : i32
    %c0_i32_2 = arith.constant 0 : i32
    return %c0_i32, %c0_i32_0, %c0_i32_1 : i32, i32, i32
  }
  func.func @transform_3(%arg0: i32) -> (i32, i32, i32) {
    %c0_i32 = arith.constant 0 : i32
    %c0_i32_0 = arith.constant 0 : i32
    %c0_i32_1 = arith.constant 0 : i32
    %c0_i32_2 = arith.constant 0 : i32
    return %c0_i32, %c0_i32_0, %c0_i32_1 : i32, i32, i32
  }
  func.func @transform_4(%arg0: i32) -> (i32, i32) {
    %c0_i32 = arith.constant 0 : i32
    %c0_i32_0 = arith.constant 0 : i32
    %c0_i32_1 = arith.constant 0 : i32
    return %c0_i32, %c0_i32_0 : i32, i32
  }
  func.func @transform_5(%arg0: i32) -> (i32, i32) {
    %c0_i32 = arith.constant 0 : i32
    %c0_i32_0 = arith.constant 0 : i32
    %c0_i32_1 = arith.constant 0 : i32
    return %c0_i32, %c0_i32_0 : i32, i32
  }
  func.func @transform_6(%arg0: i32) -> (i32, i32) {
    %c0_i32 = arith.constant 0 : i32
    %c0_i32_0 = arith.constant 0 : i32
    return %arg0, %c0_i32 : i32, i32
  }
}

module attributes {stable_mosaic.version = 11 : i64} {
  func.func @_aux_classifier_kernel(%arg0: i32, %arg1: memref<8x32xbf16, #tpu.memory_space<vmem>>, %arg2: memref<32x128xbf16, #tpu.memory_space<vmem>>, %arg3: memref<1x128x128xbf16, #tpu.memory_space<vmem>>, %arg4: memref<2x1x128xf32, #tpu.memory_space<vmem>>, %arg5: memref<128x128xbf16, #tpu.memory_space<vmem>>, %arg6: memref<1x128xf32, #tpu.memory_space<vmem>>, %arg7: memref<8x128xf32, #tpu.memory_space<vmem>>) attributes {dimension_semantics = [#tpu.dimension_semantics<parallel>], iteration_bounds = array<i64: 1>, scalar_prefetch = 0 : i64, scratch_operands = 0 : i64, tpu.core_type = #tpu.core_type<tc>, window_params = [{transform_indices = @transform_0, window_bounds = array<i64: 8, 32>}, {pipeline_mode = #tpu.pipeline_mode<synchronous>, transform_indices = @transform_1, window_bounds = array<i64: 32, 128>}, {pipeline_mode = #tpu.pipeline_mode<synchronous>, transform_indices = @transform_2, window_bounds = array<i64: 1, 128, 128>}, {pipeline_mode = #tpu.pipeline_mode<synchronous>, transform_indices = @transform_3, window_bounds = array<i64: 2, 1, 128>}, {pipeline_mode = #tpu.pipeline_mode<synchronous>, transform_indices = @transform_4, window_bounds = array<i64: 128, 128>}, {pipeline_mode = #tpu.pipeline_mode<synchronous>, transform_indices = @transform_5, window_bounds = array<i64: 1, 128>}, {transform_indices = @transform_6, window_bounds = array<i64: 8, 128>}]} {
    %c0 = arith.constant 0 : index
    %c0_0 = arith.constant 0 : index
    %0 = vector.load %arg1[%c0, %c0_0] : memref<8x32xbf16, #tpu.memory_space<vmem>>, vector<8x32xbf16>
    %c0_1 = arith.constant 0 : index
    %c0_2 = arith.constant 0 : index
    %1 = vector.load %arg2[%c0_1, %c0_2] : memref<32x128xbf16, #tpu.memory_space<vmem>>, vector<32x128xbf16>
    %cst = arith.constant dense<0.000000e+00> : vector<8x128xf32>
    %2 = tpu.matmul %0, %1, %cst {dimension_numbers = #tpu.dot_dimension_numbers<[1], [0], [0], [1], [0, 0, 1, 1], [], []>} : vector<8x32xbf16>, vector<32x128xbf16>, vector<8x128xf32> -> vector<8x128xf32>
    %c0_3 = arith.constant 0 : index
    %c0_4 = arith.constant 0 : index
    %c0_5 = arith.constant 0 : index
    %3 = vector.load %arg4[%c0_3, %c0_4, %c0_5] : memref<2x1x128xf32, #tpu.memory_space<vmem>>, vector<1x1x128xf32>
    %4 = vector.shape_cast %3 : vector<1x1x128xf32> to vector<1x128xf32>
    %5 = vector.broadcast %4 : vector<1x128xf32> to vector<8x128xf32>
    %6 = arith.addf %2, %5 : vector<8x128xf32>
    %cst_6 = arith.constant 0.000000e+00 : f32
    %7 = vector.broadcast %cst_6 : f32 to vector<8x128xf32>
    %8 = arith.maximumf %6, %7 : vector<8x128xf32>
    %9 = arith.truncf %8 : vector<8x128xf32> to vector<8x128xbf16>
    %c0_7 = arith.constant 0 : index
    %c0_8 = arith.constant 0 : index
    %c0_9 = arith.constant 0 : index
    %10 = vector.load %arg3[%c0_7, %c0_8, %c0_9] : memref<1x128x128xbf16, #tpu.memory_space<vmem>>, vector<1x128x128xbf16>
    %11 = vector.shape_cast %10 : vector<1x128x128xbf16> to vector<128x128xbf16>
    %cst_10 = arith.constant dense<0.000000e+00> : vector<8x128xf32>
    %12 = tpu.matmul %9, %11, %cst_10 {dimension_numbers = #tpu.dot_dimension_numbers<[1], [0], [0], [1], [0, 0, 1, 1], [], []>} : vector<8x128xbf16>, vector<128x128xbf16>, vector<8x128xf32> -> vector<8x128xf32>
    %c1 = arith.constant 1 : index
    %c0_11 = arith.constant 0 : index
    %c0_12 = arith.constant 0 : index
    %13 = vector.load %arg4[%c1, %c0_11, %c0_12] : memref<2x1x128xf32, #tpu.memory_space<vmem>>, vector<1x1x128xf32>
    %14 = vector.shape_cast %13 : vector<1x1x128xf32> to vector<1x128xf32>
    %15 = vector.broadcast %14 : vector<1x128xf32> to vector<8x128xf32>
    %16 = arith.addf %12, %15 : vector<8x128xf32>
    %cst_13 = arith.constant 0.000000e+00 : f32
    %17 = vector.broadcast %cst_13 : f32 to vector<8x128xf32>
    %18 = arith.maximumf %16, %17 : vector<8x128xf32>
    %19 = arith.truncf %18 : vector<8x128xf32> to vector<8x128xbf16>
    %c0_14 = arith.constant 0 : index
    %c0_15 = arith.constant 0 : index
    %20 = vector.load %arg5[%c0_14, %c0_15] : memref<128x128xbf16, #tpu.memory_space<vmem>>, vector<128x128xbf16>
    %cst_16 = arith.constant dense<0.000000e+00> : vector<8x128xf32>
    %21 = tpu.matmul %19, %20, %cst_16 {dimension_numbers = #tpu.dot_dimension_numbers<[1], [0], [0], [1], [0, 0, 1, 1], [], []>} : vector<8x128xbf16>, vector<128x128xbf16>, vector<8x128xf32> -> vector<8x128xf32>
    %c0_17 = arith.constant 0 : index
    %c0_18 = arith.constant 0 : index
    %22 = vector.load %arg6[%c0_17, %c0_18] : memref<1x128xf32, #tpu.memory_space<vmem>>, vector<1x128xf32>
    %23 = vector.broadcast %22 : vector<1x128xf32> to vector<8x128xf32>
    %24 = arith.addf %21, %23 : vector<8x128xf32>
    %c0_19 = arith.constant 0 : index
    %c0_20 = arith.constant 0 : index
    %25 = vector.load %arg7[%c0_19, %c0_20] : memref<8x128xf32, #tpu.memory_space<vmem>>, vector<8x128xf32>
    tpu.vector_store %arg7[%c0_19, %c0_20], %24 {strides = array<i32>} : memref<8x128xf32, #tpu.memory_space<vmem>>, vector<8x128xf32>,
    return
  }
  func.func @transform_0(%arg0: i32) -> (i32, i32) {
    %c0_i32 = arith.constant 0 : i32
    %c0_i32_0 = arith.constant 0 : i32
    return %arg0, %c0_i32 : i32, i32
  }
  func.func @transform_1(%arg0: i32) -> (i32, i32) {
    %c0_i32 = arith.constant 0 : i32
    %c0_i32_0 = arith.constant 0 : i32
    %c0_i32_1 = arith.constant 0 : i32
    return %c0_i32, %c0_i32_0 : i32, i32
  }
  func.func @transform_2(%arg0: i32) -> (i32, i32, i32) {
    %c0_i32 = arith.constant 0 : i32
    %c0_i32_0 = arith.constant 0 : i32
    %c0_i32_1 = arith.constant 0 : i32
    %c0_i32_2 = arith.constant 0 : i32
    return %c0_i32, %c0_i32_0, %c0_i32_1 : i32, i32, i32
  }
  func.func @transform_3(%arg0: i32) -> (i32, i32, i32) {
    %c0_i32 = arith.constant 0 : i32
    %c0_i32_0 = arith.constant 0 : i32
    %c0_i32_1 = arith.constant 0 : i32
    %c0_i32_2 = arith.constant 0 : i32
    return %c0_i32, %c0_i32_0, %c0_i32_1 : i32, i32, i32
  }
  func.func @transform_4(%arg0: i32) -> (i32, i32) {
    %c0_i32 = arith.constant 0 : i32
    %c0_i32_0 = arith.constant 0 : i32
    %c0_i32_1 = arith.constant 0 : i32
    return %c0_i32, %c0_i32_0 : i32, i32
  }
  func.func @transform_5(%arg0: i32) -> (i32, i32) {
    %c0_i32 = arith.constant 0 : i32
    %c0_i32_0 = arith.constant 0 : i32
    %c0_i32_1 = arith.constant 0 : i32
    return %c0_i32, %c0_i32_0 : i32, i32
  }
  func.func @transform_6(%arg0: i32) -> (i32, i32) {
    %c0_i32 = arith.constant 0 : i32
    %c0_i32_0 = arith.constant 0 : i32
    return %arg0, %c0_i32 : i32, i32
  }
}

</mosaic_0001>

<llo_original>
// kernel: tpu_custom_call.1
$region0: #{tpu_custom_call.1}
  #allocation0 [shape = 'u32[]', space=smem, size = 0x4, offset = 0x4, fixed_abs, tag = 'smem constant byte address 0x4 - core index']
  #allocation1 [shape = 'u32[72,128]{1,0:T(1,128)}', space=vmem, size = 0x9000, scoped, tag = 'internal scratch']
  %s0 = inlined_call_operand.hbm [shape: bf16[8,32], index: 0, kind: input, shape index: {}]
  %s1 = inlined_call_operand.hbm [shape: bf16[32,128], index: 1, kind: input, shape index: {}]
  %s2 = inlined_call_operand.hbm [shape: bf16[1,128,128], index: 2, kind: input, shape index: {}]
  %s3 = inlined_call_operand.vmem [shape: f32[2,1,128], index: 3, kind: input, shape index: {}]
  %s4 = inlined_call_operand.hbm [shape: bf16[128,128], index: 4, kind: input, shape index: {}]
  %s5 = inlined_call_operand.vmem [shape: f32[1,128], index: 5, kind: input, shape index: {}]
  %s6 = inlined_call_operand.hbm [shape: f32[8,128], index: 6, kind: output, shape index: {}]
  %s7 = sld [smem:[#allocation0]]
  $region50: #{tpu_custom_call.1} parent=0
    _
  %s9 = ssub.s32 1, %s7
  %s10 = scalar_select 0, %s9, %s7
  $region1: #{tpu_custom_call.1} parent=0
    #allocation2 [shape = 'u8[2048]{0}', space=vmem, size = 0x800, scoped, tag = 'input window, operand 0, single buffered']
    #allocation3 [shape = 's32[1]{0}', space=sflag, size = 0x4, scoped, tag = 'scoped memory for tpu_custom_call.1']
    #allocation4 [shape = 's32[1]{0}', space=sflag, size = 0x4, scoped, tag = 'scoped memory for tpu_custom_call.1']
    #allocation5 [shape = 'u8[8192]{0}', space=vmem, size = 0x2000, scoped, tag = 'input window, operand 1, single buffered']
    #allocation6 [shape = 's32[1]{0}', space=sflag, size = 0x4, scoped, tag = 'scoped memory for tpu_custom_call.1']
    #allocation7 [shape = 'u8[32768]{0}', space=vmem, size = 0x8000, scoped, tag = 'input window, operand 2, single buffered']
    #allocation8 [shape = 'u8[32768]{0}', space=vmem, size = 0x8000, scoped, tag = 'input window, operand 4, single buffered']
    #allocation9 [shape = 's32[1]{0}', space=sflag, size = 0x4, scoped, tag = 'scoped memory for tpu_custom_call.1']
    #allocation10 [shape = 'u8[4096]{0}', space=vmem, size = 0x1000, scoped, tag = 'output window, operand 0, single buffered']
    %11 = vsyncpa [#allocation3], 0
    %12 = vsyncpa [#allocation6], 0
    %13 = vsyncpa [#allocation9], 0
    %14 = vsyncpa [#allocation4], 0
    // Predicated region
    $region2: #{tpu_custom_call.1} parent=1 // pred_check
      _
    $region3: #{tpu_custom_call.1} parent=1 // pred_check_branch
      %16 = sbr.rel (0) target = $region5
    $region4: #{tpu_custom_call.1} parent=1 // pred_region
      %18 = vsyncadd [#allocation3], 0
      %s20 = sshll.u32 %s0, 4
      %s21 = int_to_ptr.hbm [resolvable:$true] %s20
      %s22 = sshll.u32 [#allocation2], 4
      %s23 = int_to_ptr.vmem [resolvable:$true] %s22
      %25 = dma.hbm_to_vmem [thread:$0]  %s21, 64, %s23, [#allocation3]
    $region5: #{tpu_custom_call.1} parent=1 // pred_fallthru
      _
    // Predicated region
    $region6: #{tpu_custom_call.1} parent=1 // pred_check
      _
    $region7: #{tpu_custom_call.1} parent=1 // pred_check_branch
      %27 = sbr.rel (0) target = $region9
    $region8: #{tpu_custom_call.1} parent=1 // pred_region
      %29 = vsyncadd [#allocation6], 0
      %s30 = sshll.u32 %s1, 4
      %s31 = int_to_ptr.hbm [resolvable:$true] %s30
      %s32 = sshll.u32 [#allocation5], 4
      %s33 = int_to_ptr.vmem [resolvable:$true] %s32
      %38 = dma.hbm_to_vmem [thread:$0]  %s31, 256, %s33, [#allocation6], 64, 64, 4
    $region9: #{tpu_custom_call.1} parent=1 // pred_fallthru
      _
    // Predicated region
    $region10: #{tpu_custom_call.1} parent=1 // pred_check
      _
    $region11: #{tpu_custom_call.1} parent=1 // pred_check_branch
      %40 = sbr.rel (0) target = $region13
    $region12: #{tpu_custom_call.1} parent=1 // pred_region
      %42 = vsyncadd [#allocation6], 0
      %s43 = sshll.u32 %s2, 4
      %s44 = int_to_ptr.hbm [resolvable:$true] %s43
      %s45 = sshll.u32 [#allocation7], 4
      %s46 = int_to_ptr.vmem [resolvable:$true] %s45
      %51 = dma.hbm_to_vmem [thread:$0]  %s44, 1024, %s46, [#allocation6], 64, 64, 4
    $region13: #{tpu_custom_call.1} parent=1 // pred_fallthru
      _
    // Predicated region
    $region14: #{tpu_custom_call.1} parent=1 // pred_check
      _
    $region15: #{tpu_custom_call.1} parent=1 // pred_check_branch
      %53 = sbr.rel (0) target = $region17
    $region16: #{tpu_custom_call.1} parent=1 // pred_region
      _
    $region17: #{tpu_custom_call.1} parent=1 // pred_fallthru
      _
    // Predicated region
    $region18: #{tpu_custom_call.1} parent=1 // pred_check
      _
    $region19: #{tpu_custom_call.1} parent=1 // pred_check_branch
      %55 = sbr.rel (0) target = $region21
    $region20: #{tpu_custom_call.1} parent=1 // pred_region
      %57 = vsyncadd [#allocation9], 0
      %s58 = sshll.u32 %s4, 4
      %s59 = int_to_ptr.hbm [resolvable:$true] %s58
      %s60 = sshll.u32 [#allocation8], 4
      %s61 = int_to_ptr.vmem [resolvable:$true] %s60
      %66 = dma.hbm_to_vmem [thread:$0]  %s59, 1024, %s61, [#allocation9], 64, 64, 4
    $region21: #{tpu_custom_call.1} parent=1 // pred_fallthru
      _
    // Predicated region
    $region22: #{tpu_custom_call.1} parent=1 // pred_check
      _
    $region23: #{tpu_custom_call.1} parent=1 // pred_check_branch
      %68 = sbr.rel (0) target = $region25
    $region24: #{tpu_custom_call.1} parent=1 // pred_region
      _
    $region25: #{tpu_custom_call.1} parent=1 // pred_fallthru
      _
    // Predicated region
    $region26: #{tpu_custom_call.1} parent=1 // pred_check
      _
    $region27: #{tpu_custom_call.1} parent=1 // pred_check_branch
      %70 = sbr.rel (0) target = $region29
    $region28: #{tpu_custom_call.1} parent=1 // pred_region
      %72 = dma.done [#allocation3], 64
    $region29: #{tpu_custom_call.1} parent=1 // pred_fallthru
      _
    // Predicated region
    $region30: #{tpu_custom_call.1} parent=1 // pred_check
      _
    $region31: #{tpu_custom_call.1} parent=1 // pred_check_branch
      %74 = sbr.rel (0) target = $region33
    $region32: #{tpu_custom_call.1} parent=1 // pred_region
      %76 = dma.done [#allocation6], 256
    $region33: #{tpu_custom_call.1} parent=1 // pred_fallthru
      _
    // Predicated region
    $region34: #{tpu_custom_call.1} parent=1 // pred_check
      _
    $region35: #{tpu_custom_call.1} parent=1 // pred_check_branch
      %78 = sbr.rel (0) target = $region37
    $region36: #{tpu_custom_call.1} parent=1 // pred_region
      %80 = dma.done [#allocation6], 1024
    $region37: #{tpu_custom_call.1} parent=1 // pred_fallthru
      _
    // Predicated region
    $region38: #{tpu_custom_call.1} parent=1 // pred_check
      _
    $region39: #{tpu_custom_call.1} parent=1 // pred_check_branch
      %82 = sbr.rel (0) target = $region41
    $region40: #{tpu_custom_call.1} parent=1 // pred_region
      %84 = dma.done [#allocation9], 1024
    $region41: #{tpu_custom_call.1} parent=1 // pred_fallthru
      _
    %v86 = vld [vmem:[#allocation2] sm:$0xf]
    %v87 = vld [vmem:[#allocation5] sm:$0xf]
    %v88 = vld [vmem:[#allocation5 + $0x4] sm:$0xf]
    %v89 = vld [vmem:[#allocation5 + $0x8] sm:$0xf]
    %v90 = vld [vmem:[#allocation5 + $0xc] sm:$0xf]
    %v91 = vld [vmem:[%s3] sm:$0x1]
    %v93 = vperm.slane %v91, 0
    %v99 = vunpack.c.l.b16 %v87
    %v100 = vunpack.c.l.b16 %v88
    %v101 = vunpack.c.l.b16 %v89
    %v102 = vunpack.c.l.b16 %v90
    %v103 = vpack.c.b16 %v100, %v99
    %v104 = vpack.c.b16 %v102, %v101
    %vm107 = vcmask 261120
    %v109 = vsel %vm107, %v86, 0
    %111 = vmatpush.bf16.msra.mxu0 0
    %112 = vmatpush.bf16.msra.mxu0 0
    %113 = vmatpush.bf16.msra.mxu0 0
    %114 = vmatpush.bf16.msra.mxu0 0
    %115 = vmatpush.bf16.msra.mxu0 0
    %116 = vmatpush.bf16.msra.mxu0 0
    %117 = vmatpush.bf16.msra.mxu0 %v104
    %118 = vmatpush.bf16.msra.mxu0 %v103
    %119 = vmatmul.bf16.gmra.mxu0 %v109
    %v120 = vpop.f32.mrf.mxu0
    %v121 = vadd.f32 %v93, %v120
    %v122 = vpop.f32.mrf.mxu0
    %123 = vdwg.mxu0
    %v124 = vmax.f32 %v121, 0.0
    %v125 = vpack.c.bf16 %v124, %v124
    %v126 = vld [vmem:[#allocation7] sm:$0xf]
    %v127 = vld [vmem:[#allocation7 + $0x4] sm:$0xf]
    %v128 = vld [vmem:[#allocation7 + $0x8] sm:$0xf]
    %v129 = vld [vmem:[#allocation7 + $0xc] sm:$0xf]
    %v130 = vld [vmem:[#allocation7 + $0x10] sm:$0xf]
    %v131 = vld [vmem:[#allocation7 + $0x14] sm:$0xf]
    %v132 = vld [vmem:[#allocation7 + $0x18] sm:$0xf]
    %v133 = vld [vmem:[#allocation7 + $0x1c] sm:$0xf]
    %v134 = vld [vmem:[#allocation7 + $0x20] sm:$0xf]
    %v135 = vld [vmem:[#allocation7 + $0x24] sm:$0xf]
    %v136 = vld [vmem:[#allocation7 + $0x28] sm:$0xf]
    %v137 = vld [vmem:[#allocation7 + $0x2c] sm:$0xf]
    %v138 = vld [vmem:[#allocation7 + $0x30] sm:$0xf]
    %v139 = vld [vmem:[#allocation7 + $0x34] sm:$0xf]
    %v140 = vld [vmem:[#allocation7 + $0x38] sm:$0xf]
    %v141 = vld [vmem:[#allocation7 + $0x3c] sm:$0xf]
    %s142 = scalar_lea.vmem %s3, 1
    %v143 = vld [vmem:[%s142] sm:$0x1]
    %v145 = vperm.slane %v143, 0
    %v163 = vunpack.c.l.b16 %v126
    %v164 = vunpack.c.l.b16 %v127
    %v165 = vunpack.c.l.b16 %v128
    %v166 = vunpack.c.l.b16 %v129
    %v167 = vunpack.c.l.b16 %v130
    %v168 = vunpack.c.l.b16 %v131
    %v169 = vunpack.c.l.b16 %v132
    %v170 = vunpack.c.l.b16 %v133
    %v171 = vunpack.c.l.b16 %v134
    %v172 = vunpack.c.l.b16 %v135
    %v173 = vunpack.c.l.b16 %v136
    %v174 = vunpack.c.l.b16 %v137
    %v175 = vunpack.c.l.b16 %v138
    %v176 = vunpack.c.l.b16 %v139
    %v177 = vunpack.c.l.b16 %v140
    %v178 = vunpack.c.l.b16 %v141
    %v179 = vpack.c.b16 %v164, %v163
    %v180 = vpack.c.b16 %v166, %v165
    %v181 = vpack.c.b16 %v168, %v167
    %v182 = vpack.c.b16 %v170, %v169
    %v183 = vpack.c.b16 %v172, %v171
    %v184 = vpack.c.b16 %v174, %v173
    %v185 = vpack.c.b16 %v176, %v175
    %v186 = vpack.c.b16 %v178, %v177
    %195 = vmatpush.bf16.msra.mxu0 %v186
    %196 = vmatpush.bf16.msra.mxu0 %v185
    %197 = vmatpush.bf16.msra.mxu0 %v184
    %198 = vmatpush.bf16.msra.mxu0 %v183
    %199 = vmatpush.bf16.msra.mxu0 %v182
    %200 = vmatpush.bf16.msra.mxu0 %v181
    %201 = vmatpush.bf16.msra.mxu0 %v180
    %202 = vmatpush.bf16.msra.mxu0 %v179
    %203 = vmatmul.bf16.gmra.mxu0 %v125
    %v204 = vpop.f32.mrf.mxu0
    %v205 = vadd.f32 %v145, %v204
    %v206 = vpop.f32.mrf.mxu0
    %207 = vdwg.mxu0
    %v208 = vmax.f32 %v205, 0.0
    %v209 = vpack.c.bf16 %v208, %v208
    %v210 = vld [vmem:[#allocation8] sm:$0xf]
    %v211 = vld [vmem:[#allocation8 + $0x4] sm:$0xf]
    %v212 = vld [vmem:[#allocation8 + $0x8] sm:$0xf]
    %v213 = vld [vmem:[#allocation8 + $0xc] sm:$0xf]
    %v214 = vld [vmem:[#allocation8 + $0x10] sm:$0xf]
    %v215 = vld [vmem:[#allocation8 + $0x14] sm:$0xf]
    %v216 = vld [vmem:[#allocation8 + $0x18] sm:$0xf]
    %v217 = vld [vmem:[#allocation8 + $0x1c] sm:$0xf]
    %v218 = vld [vmem:[#allocation8 + $0x20] sm:$0xf]
    %v219 = vld [vmem:[#allocation8 + $0x24] sm:$0xf]
    %v220 = vld [vmem:[#allocation8 + $0x28] sm:$0xf]
    %v221 = vld [vmem:[#allocation8 + $0x2c] sm:$0xf]
    %v222 = vld [vmem:[#allocation8 + $0x30] sm:$0xf]
    %v223 = vld [vmem:[#allocation8 + $0x34] sm:$0xf]
    %v224 = vld [vmem:[#allocation8 + $0x38] sm:$0xf]
    %v225 = vld [vmem:[#allocation8 + $0x3c] sm:$0xf]
    %v226 = vld [vmem:[%s5] sm:$0x1]
    %v228 = vperm.slane %v226, 0
    %v246 = vunpack.c.l.b16 %v210
    %v247 = vunpack.c.l.b16 %v211
    %v248 = vunpack.c.l.b16 %v212
    %v249 = vunpack.c.l.b16 %v213
    %v250 = vunpack.c.l.b16 %v214
    %v251 = vunpack.c.l.b16 %v215
    %v252 = vunpack.c.l.b16 %v216
    %v253 = vunpack.c.l.b16 %v217
    %v254 = vunpack.c.l.b16 %v218
    %v255 = vunpack.c.l.b16 %v219
    %v256 = vunpack.c.l.b16 %v220
    %v257 = vunpack.c.l.b16 %v221
    %v258 = vunpack.c.l.b16 %v222
    %v259 = vunpack.c.l.b16 %v223
    %v260 = vunpack.c.l.b16 %v224
    %v261 = vunpack.c.l.b16 %v225
    %v262 = vpack.c.b16 %v247, %v246
    %v263 = vpack.c.b16 %v249, %v248
    %v264 = vpack.c.b16 %v251, %v250
    %v265 = vpack.c.b16 %v253, %v252
    %v266 = vpack.c.b16 %v255, %v254
    %v267 = vpack.c.b16 %v257, %v256
    %v268 = vpack.c.b16 %v259, %v258
    %v269 = vpack.c.b16 %v261, %v260
    %278 = vmatpush.bf16.msra.mxu0 %v269
    %279 = vmatpush.bf16.msra.mxu0 %v268
    %280 = vmatpush.bf16.msra.mxu0 %v267
    %281 = vmatpush.bf16.msra.mxu0 %v266
    %282 = vmatpush.bf16.msra.mxu0 %v265
    %283 = vmatpush.bf16.msra.mxu0 %v264
    %284 = vmatpush.bf16.msra.mxu0 %v263
    %285 = vmatpush.bf16.msra.mxu0 %v262
    %286 = vmatmul.bf16.gmra.mxu0 %v209
    %v287 = vpop.f32.mrf.mxu0
    %v288 = vadd.f32 %v228, %v287
    %v289 = vpop.f32.mrf.mxu0
    %290 = vdwg.mxu0
    %291 = vst [vmem:[#allocation10] sm:$0xff] %v288
    // Predicated region
    $region42: #{tpu_custom_call.1} parent=1 // pred_check
      _
    $region43: #{tpu_custom_call.1} parent=1 // pred_check_branch
      %293 = sbr.rel (0) target = $region45
    $region44: #{tpu_custom_call.1} parent=1 // pred_region
      %295 = vsyncadd [#allocation4], 0
      %s297 = sshll.u32 [#allocation10], 4
      %s298 = int_to_ptr.vmem [resolvable:$true] %s297
      %s299 = sshll.u32 %s6, 4
      %s300 = int_to_ptr.hbm [resolvable:$true] %s299
      %302 = dma.vmem_to_hbm [thread:$0]  %s298, 128, %s300, [#allocation4]
    $region45: #{tpu_custom_call.1} parent=1 // pred_fallthru
      _
    // Predicated region
    $region46: #{tpu_custom_call.1} parent=1 // pred_check
      _
    $region47: #{tpu_custom_call.1} parent=1 // pred_check_branch
      %304 = sbr.rel (0) target = $region49
    $region48: #{tpu_custom_call.1} parent=1 // pred_region
      %306 = dma.done [#allocation4], 128
    $region49: #{tpu_custom_call.1} parent=1 // pred_fallthru
      _
    %307 = vsyncpa [#allocation3], 1
    %308 = vsyncpa [#allocation6], 1
    %309 = vsyncpa [#allocation9], 1
    %310 = vsyncpa [#allocation4], 1

// kernel: tpu_custom_call.1
$region0: #{tpu_custom_call.1}
  #allocation0 [shape = 'u32[]', space=smem, size = 0x4, offset = 0x4, fixed_abs, tag = 'smem constant byte address 0x4 - core index']
  #allocation1 [shape = 'u32[72,128]{1,0:T(1,128)}', space=vmem, size = 0x9000, scoped, tag = 'internal scratch']
  %s0 = inlined_call_operand.hbm [shape: bf16[8,32], index: 0, kind: input, shape index: {}]
  %s1 = inlined_call_operand.hbm [shape: bf16[32,128], index: 1, kind: input, shape index: {}]
  %s2 = inlined_call_operand.hbm [shape: bf16[1,128,128], index: 2, kind: input, shape index: {}]
  %s3 = inlined_call_operand.vmem [shape: f32[2,1,128], index: 3, kind: input, shape index: {}]
  %s4 = inlined_call_operand.hbm [shape: bf16[128,128], index: 4, kind: input, shape index: {}]
  %s5 = inlined_call_operand.vmem [shape: f32[1,128], index: 5, kind: input, shape index: {}]
  %s6 = inlined_call_operand.hbm [shape: f32[8,128], index: 6, kind: output, shape index: {}]
  %s7 = sld [smem:[#allocation0]]
  $region50: #{tpu_custom_call.1} parent=0
    _
  %s9 = ssub.s32 1, %s7
  %s10 = scalar_select 0, %s9, %s7
  $region1: #{tpu_custom_call.1} parent=0
    #allocation2 [shape = 'u8[2048]{0}', space=vmem, size = 0x800, scoped, tag = 'input window, operand 0, single buffered']
    #allocation3 [shape = 's32[1]{0}', space=sflag, size = 0x4, scoped, tag = 'scoped memory for tpu_custom_call.1']
    #allocation4 [shape = 's32[1]{0}', space=sflag, size = 0x4, scoped, tag = 'scoped memory for tpu_custom_call.1']
    #allocation5 [shape = 'u8[8192]{0}', space=vmem, size = 0x2000, scoped, tag = 'input window, operand 1, single buffered']
    #allocation6 [shape = 's32[1]{0}', space=sflag, size = 0x4, scoped, tag = 'scoped memory for tpu_custom_call.1']
    #allocation7 [shape = 'u8[32768]{0}', space=vmem, size = 0x8000, scoped, tag = 'input window, operand 2, single buffered']
    #allocation8 [shape = 'u8[32768]{0}', space=vmem, size = 0x8000, scoped, tag = 'input window, operand 4, single buffered']
    #allocation9 [shape = 's32[1]{0}', space=sflag, size = 0x4, scoped, tag = 'scoped memory for tpu_custom_call.1']
    #allocation10 [shape = 'u8[4096]{0}', space=vmem, size = 0x1000, scoped, tag = 'output window, operand 0, single buffered']
    %11 = vsyncpa [#allocation3], 0
    %12 = vsyncpa [#allocation6], 0
    %13 = vsyncpa [#allocation9], 0
    %14 = vsyncpa [#allocation4], 0
    // Predicated region
    $region2: #{tpu_custom_call.1} parent=1 // pred_check
      _
    $region3: #{tpu_custom_call.1} parent=1 // pred_check_branch
      %16 = sbr.rel (0) target = $region5
    $region4: #{tpu_custom_call.1} parent=1 // pred_region
      %18 = vsyncadd [#allocation3], 0
      %s20 = sshll.u32 %s0, 4
      %s21 = int_to_ptr.hbm [resolvable:$true] %s20
      %s22 = sshll.u32 [#allocation2], 4
      %s23 = int_to_ptr.vmem [resolvable:$true] %s22
      %25 = dma.hbm_to_vmem [thread:$0]  %s21, 64, %s23, [#allocation3]
    $region5: #{tpu_custom_call.1} parent=1 // pred_fallthru
      _
    // Predicated region
    $region6: #{tpu_custom_call.1} parent=1 // pred_check
      _
    $region7: #{tpu_custom_call.1} parent=1 // pred_check_branch
      %27 = sbr.rel (0) target = $region9
    $region8: #{tpu_custom_call.1} parent=1 // pred_region
      %29 = vsyncadd [#allocation6], 0
      %s30 = sshll.u32 %s1, 4
      %s31 = int_to_ptr.hbm [resolvable:$true] %s30
      %s32 = sshll.u32 [#allocation5], 4
      %s33 = int_to_ptr.vmem [resolvable:$true] %s32
      %38 = dma.hbm_to_vmem [thread:$0]  %s31, 256, %s33, [#allocation6], 64, 64, 4
    $region9: #{tpu_custom_call.1} parent=1 // pred_fallthru
      _
    // Predicated region
    $region10: #{tpu_custom_call.1} parent=1 // pred_check
      _
    $region11: #{tpu_custom_call.1} parent=1 // pred_check_branch
      %40 = sbr.rel (0) target = $region13
    $region12: #{tpu_custom_call.1} parent=1 // pred_region
      %42 = vsyncadd [#allocation6], 0
      %s43 = sshll.u32 %s2, 4
      %s44 = int_to_ptr.hbm [resolvable:$true] %s43
      %s45 = sshll.u32 [#allocation7], 4
      %s46 = int_to_ptr.vmem [resolvable:$true] %s45
      %51 = dma.hbm_to_vmem [thread:$0]  %s44, 1024, %s46, [#allocation6], 64, 64, 4
    $region13: #{tpu_custom_call.1} parent=1 // pred_fallthru
      _
    // Predicated region
    $region14: #{tpu_custom_call.1} parent=1 // pred_check
      _
    $region15: #{tpu_custom_call.1} parent=1 // pred_check_branch
      %53 = sbr.rel (0) target = $region17
    $region16: #{tpu_custom_call.1} parent=1 // pred_region
      _
    $region17: #{tpu_custom_call.1} parent=1 // pred_fallthru
      _
    // Predicated region
    $region18: #{tpu_custom_call.1} parent=1 // pred_check
      _
    $region19: #{tpu_custom_call.1} parent=1 // pred_check_branch
      %55 = sbr.rel (0) target = $region21
    $region20: #{tpu_custom_call.1} parent=1 // pred_region
      %57 = vsyncadd [#allocation9], 0
      %s58 = sshll.u32 %s4, 4
      %s59 = int_to_ptr.hbm [resolvable:$true] %s58
      %s60 = sshll.u32 [#allocation8], 4
      %s61 = int_to_ptr.vmem [resolvable:$true] %s60
      %66 = dma.hbm_to_vmem [thread:$0]  %s59, 1024, %s61, [#allocation9], 64, 64, 4
    $region21: #{tpu_custom_call.1} parent=1 // pred_fallthru
      _
    // Predicated region
    $region22: #{tpu_custom_call.1} parent=1 // pred_check
      _
    $region23: #{tpu_custom_call.1} parent=1 // pred_check_branch
      %68 = sbr.rel (0) target = $region25
    $region24: #{tpu_custom_call.1} parent=1 // pred_region
      _
    $region25: #{tpu_custom_call.1} parent=1 // pred_fallthru
      _
    // Predicated region
    $region26: #{tpu_custom_call.1} parent=1 // pred_check
      _
    $region27: #{tpu_custom_call.1} parent=1 // pred_check_branch
      %70 = sbr.rel (0) target = $region29
    $region28: #{tpu_custom_call.1} parent=1 // pred_region
      %72 = dma.done [#allocation3], 64
    $region29: #{tpu_custom_call.1} parent=1 // pred_fallthru
      _
    // Predicated region
    $region30: #{tpu_custom_call.1} parent=1 // pred_check
      _
    $region31: #{tpu_custom_call.1} parent=1 // pred_check_branch
      %74 = sbr.rel (0) target = $region33
    $region32: #{tpu_custom_call.1} parent=1 // pred_region
      %76 = dma.done [#allocation6], 256
    $region33: #{tpu_custom_call.1} parent=1 // pred_fallthru
      _
    // Predicated region
    $region34: #{tpu_custom_call.1} parent=1 // pred_check
      _
    $region35: #{tpu_custom_call.1} parent=1 // pred_check_branch
      %78 = sbr.rel (0) target = $region37
    $region36: #{tpu_custom_call.1} parent=1 // pred_region
      %80 = dma.done [#allocation6], 1024
    $region37: #{tpu_custom_call.1} parent=1 // pred_fallthru
      _
    // Predicated region
    $region38: #{tpu_custom_call.1} parent=1 // pred_check
      _
    $region39: #{tpu_custom_call.1} parent=1 // pred_check_branch
      %82 = sbr.rel (0) target = $region41
    $region40: #{tpu_custom_call.1} parent=1 // pred_region
      %84 = dma.done [#allocation9], 1024
    $region41: #{tpu_custom_call.1} parent=1 // pred_fallthru
      _
    %v86 = vld [vmem:[#allocation2] sm:$0xf]
    %v87 = vld [vmem:[#allocation5] sm:$0xf]
    %v88 = vld [vmem:[#allocation5 + $0x4] sm:$0xf]
    %v89 = vld [vmem:[#allocation5 + $0x8] sm:$0xf]
    %v90 = vld [vmem:[#allocation5 + $0xc] sm:$0xf]
    %v91 = vld [vmem:[%s3] sm:$0x1]
    %v93 = vperm.slane %v91, 0
    %v99 = vunpack.c.l.b16 %v87
    %v100 = vunpack.c.l.b16 %v88
    %v101 = vunpack.c.l.b16 %v89
    %v102 = vunpack.c.l.b16 %v90
    %v103 = vpack.c.b16 %v100, %v99
    %v104 = vpack.c.b16 %v102, %v101
    %vm107 = vcmask 261120
    %v109 = vsel %vm107, %v86, 0
    %111 = vmatpush.bf16.msra.mxu0 0
    %112 = vmatpush.bf16.msra.mxu0 0
    %113 = vmatpush.bf16.msra.mxu0 0
    %114 = vmatpush.bf16.msra.mxu0 0
    %115 = vmatpush.bf16.msra.mxu0 0
    %116 = vmatpush.bf16.msra.mxu0 0
    %117 = vmatpush.bf16.msra.mxu0 %v104
    %118 = vmatpush.bf16.msra.mxu0 %v103
    %119 = vmatmul.bf16.gmra.mxu0 %v109
    %v120 = vpop.f32.mrf.mxu0
    %v121 = vadd.f32 %v93, %v120
    %v122 = vpop.f32.mrf.mxu0
    %123 = vdwg.mxu0
    %v124 = vmax.f32 %v121, 0.0
    %v125 = vpack.c.bf16 %v124, %v124
    %v126 = vld [vmem:[#allocation7] sm:$0xf]
    %v127 = vld [vmem:[#allocation7 + $0x4] sm:$0xf]
    %v128 = vld [vmem:[#allocation7 + $0x8] sm:$0xf]
    %v129 = vld [vmem:[#allocation7 + $0xc] sm:$0xf]
    %v130 = vld [vmem:[#allocation7 + $0x10] sm:$0xf]
    %v131 = vld [vmem:[#allocation7 + $0x14] sm:$0xf]
    %v132 = vld [vmem:[#allocation7 + $0x18] sm:$0xf]
    %v133 = vld [vmem:[#allocation7 + $0x1c] sm:$0xf]
    %v134 = vld [vmem:[#allocation7 + $0x20] sm:$0xf]
    %v135 = vld [vmem:[#allocation7 + $0x24] sm:$0xf]
    %v136 = vld [vmem:[#allocation7 + $0x28] sm:$0xf]
    %v137 = vld [vmem:[#allocation7 + $0x2c] sm:$0xf]
    %v138 = vld [vmem:[#allocation7 + $0x30] sm:$0xf]
    %v139 = vld [vmem:[#allocation7 + $0x34] sm:$0xf]
    %v140 = vld [vmem:[#allocation7 + $0x38] sm:$0xf]
    %v141 = vld [vmem:[#allocation7 + $0x3c] sm:$0xf]
    %s142 = scalar_lea.vmem %s3, 1
    %v143 = vld [vmem:[%s142] sm:$0x1]
    %v145 = vperm.slane %v143, 0
    %v163 = vunpack.c.l.b16 %v126
    %v164 = vunpack.c.l.b16 %v127
    %v165 = vunpack.c.l.b16 %v128
    %v166 = vunpack.c.l.b16 %v129
    %v167 = vunpack.c.l.b16 %v130
    %v168 = vunpack.c.l.b16 %v131
    %v169 = vunpack.c.l.b16 %v132
    %v170 = vunpack.c.l.b16 %v133
    %v171 = vunpack.c.l.b16 %v134
    %v172 = vunpack.c.l.b16 %v135
    %v173 = vunpack.c.l.b16 %v136
    %v174 = vunpack.c.l.b16 %v137
    %v175 = vunpack.c.l.b16 %v138
    %v176 = vunpack.c.l.b16 %v139
    %v177 = vunpack.c.l.b16 %v140
    %v178 = vunpack.c.l.b16 %v141
    %v179 = vpack.c.b16 %v164, %v163
    %v180 = vpack.c.b16 %v166, %v165
    %v181 = vpack.c.b16 %v168, %v167
    %v182 = vpack.c.b16 %v170, %v169
    %v183 = vpack.c.b16 %v172, %v171
    %v184 = vpack.c.b16 %v174, %v173
    %v185 = vpack.c.b16 %v176, %v175
    %v186 = vpack.c.b16 %v178, %v177
    %195 = vmatpush.bf16.msra.mxu0 %v186
    %196 = vmatpush.bf16.msra.mxu0 %v185
    %197 = vmatpush.bf16.msra.mxu0 %v184
    %198 = vmatpush.bf16.msra.mxu0 %v183
    %199 = vmatpush.bf16.msra.mxu0 %v182
    %200 = vmatpush.bf16.msra.mxu0 %v181
    %201 = vmatpush.bf16.msra.mxu0 %v180
    %202 = vmatpush.bf16.msra.mxu0 %v179
    %203 = vmatmul.bf16.gmra.mxu0 %v125
    %v204 = vpop.f32.mrf.mxu0
    %v205 = vadd.f32 %v145, %v204
    %v206 = vpop.f32.mrf.mxu0
    %207 = vdwg.mxu0
    %v208 = vmax.f32 %v205, 0.0
    %v209 = vpack.c.bf16 %v208, %v208
    %v210 = vld [vmem:[#allocation8] sm:$0xf]
    %v211 = vld [vmem:[#allocation8 + $0x4] sm:$0xf]
    %v212 = vld [vmem:[#allocation8 + $0x8] sm:$0xf]
    %v213 = vld [vmem:[#allocation8 + $0xc] sm:$0xf]
    %v214 = vld [vmem:[#allocation8 + $0x10] sm:$0xf]
    %v215 = vld [vmem:[#allocation8 + $0x14] sm:$0xf]
    %v216 = vld [vmem:[#allocation8 + $0x18] sm:$0xf]
    %v217 = vld [vmem:[#allocation8 + $0x1c] sm:$0xf]
    %v218 = vld [vmem:[#allocation8 + $0x20] sm:$0xf]
    %v219 = vld [vmem:[#allocation8 + $0x24] sm:$0xf]
    %v220 = vld [vmem:[#allocation8 + $0x28] sm:$0xf]
    %v221 = vld [vmem:[#allocation8 + $0x2c] sm:$0xf]
    %v222 = vld [vmem:[#allocation8 + $0x30] sm:$0xf]
    %v223 = vld [vmem:[#allocation8 + $0x34] sm:$0xf]
    %v224 = vld [vmem:[#allocation8 + $0x38] sm:$0xf]
    %v225 = vld [vmem:[#allocation8 + $0x3c] sm:$0xf]
    %v226 = vld [vmem:[%s5] sm:$0x1]
    %v228 = vperm.slane %v226, 0
    %v246 = vunpack.c.l.b16 %v210
    %v247 = vunpack.c.l.b16 %v211
    %v248 = vunpack.c.l.b16 %v212
    %v249 = vunpack.c.l.b16 %v213
    %v250 = vunpack.c.l.b16 %v214
    %v251 = vunpack.c.l.b16 %v215
    %v252 = vunpack.c.l.b16 %v216
    %v253 = vunpack.c.l.b16 %v217
    %v254 = vunpack.c.l.b16 %v218
    %v255 = vunpack.c.l.b16 %v219
    %v256 = vunpack.c.l.b16 %v220
    %v257 = vunpack.c.l.b16 %v221
    %v258 = vunpack.c.l.b16 %v222
    %v259 = vunpack.c.l.b16 %v223
    %v260 = vunpack.c.l.b16 %v224
    %v261 = vunpack.c.l.b16 %v225
    %v262 = vpack.c.b16 %v247, %v246
    %v263 = vpack.c.b16 %v249, %v248
    %v264 = vpack.c.b16 %v251, %v250
    %v265 = vpack.c.b16 %v253, %v252
    %v266 = vpack.c.b16 %v255, %v254
    %v267 = vpack.c.b16 %v257, %v256
    %v268 = vpack.c.b16 %v259, %v258
    %v269 = vpack.c.b16 %v261, %v260
    %278 = vmatpush.bf16.msra.mxu0 %v269
    %279 = vmatpush.bf16.msra.mxu0 %v268
    %280 = vmatpush.bf16.msra.mxu0 %v267
    %281 = vmatpush.bf16.msra.mxu0 %v266
    %282 = vmatpush.bf16.msra.mxu0 %v265
    %283 = vmatpush.bf16.msra.mxu0 %v264
    %284 = vmatpush.bf16.msra.mxu0 %v263
    %285 = vmatpush.bf16.msra.mxu0 %v262
    %286 = vmatmul.bf16.gmra.mxu0 %v209
    %v287 = vpop.f32.mrf.mxu0
    %v288 = vadd.f32 %v228, %v287
    %v289 = vpop.f32.mrf.mxu0
    %290 = vdwg.mxu0
    %291 = vst [vmem:[#allocation10] sm:$0xff] %v288
    // Predicated region
    $region42: #{tpu_custom_call.1} parent=1 // pred_check
      _
    $region43: #{tpu_custom_call.1} parent=1 // pred_check_branch
      %293 = sbr.rel (0) target = $region45
    $region44: #{tpu_custom_call.1} parent=1 // pred_region
      %295 = vsyncadd [#allocation4], 0
      %s297 = sshll.u32 [#allocation10], 4
      %s298 = int_to_ptr.vmem [resolvable:$true] %s297
      %s299 = sshll.u32 %s6, 4
      %s300 = int_to_ptr.hbm [resolvable:$true] %s299
      %302 = dma.vmem_to_hbm [thread:$0]  %s298, 128, %s300, [#allocation4]
    $region45: #{tpu_custom_call.1} parent=1 // pred_fallthru
      _
    // Predicated region
    $region46: #{tpu_custom_call.1} parent=1 // pred_check
      _
    $region47: #{tpu_custom_call.1} parent=1 // pred_check_branch
      %304 = sbr.rel (0) target = $region49
    $region48: #{tpu_custom_call.1} parent=1 // pred_region
      %306 = dma.done [#allocation4], 128
    $region49: #{tpu_custom_call.1} parent=1 // pred_fallthru
      _
    %307 = vsyncpa [#allocation3], 1
    %308 = vsyncpa [#allocation6], 1
    %309 = vsyncpa [#allocation9], 1
    %310 = vsyncpa [#allocation4], 1

</llo_original>
